<compile_context>
chip_gen: v7x
topology: tpu7x:2x2x1
jax: 0.10.0
libtpu: 0.0.40
codegen_flags: <defaults>
</compile_context>

<pallas_src>
import functools

import jax
import jax.numpy as jnp
from jax import lax
from jax.experimental import pallas as pl
from jax.experimental.pallas import tpu as pltpu

_BN_EPS = 1e-5
_VMEM_LIMIT = 40 * 1024 * 1024          # fits v7x (64 MiB phys) and raises v5e's 16 MiB default


def _round_up(x, m):
    return (x + m - 1) // m * m


# ----------------------------------------------------------------------------
# Matmul with resident weights (tk=K, tn=N, grid over M only) + fused
# per-channel sum / sum-of-squares epilogue.  "prebn" variant applies the
# previous layer's BN+ReLU to the A operand in-kernel.
# ----------------------------------------------------------------------------
def _mm_plain_kernel(a_ref, b_ref, o_ref, sum_ref, sq_ref):
    acc = jnp.dot(a_ref[...], b_ref[...], preferred_element_type=jnp.float32)
    o_ref[...] = acc.astype(o_ref.dtype)
    sum_ref[...] = jnp.sum(acc, axis=0, keepdims=True)[None]
    sq_ref[...] = jnp.sum(acc * acc, axis=0, keepdims=True)[None]


def _mm_prebn_kernel(a_ref, s_ref, t_ref, b_ref, o_ref, sum_ref, sq_ref,
                     *, tm, m_valid, mask):
    a = a_ref[...].astype(jnp.float32) * s_ref[...] + t_ref[...]
    a = jnp.maximum(a, 0.0)
    if mask:
        # zero the M-padding rows so the BN statistics stay exact
        rows = pl.program_id(0) * tm + lax.broadcasted_iota(
            jnp.int32, (a.shape[0], 1), 0)
        a = jnp.where(rows < m_valid, a, 0.0)
    acc = jnp.dot(a.astype(jnp.bfloat16), b_ref[...],
                  preferred_element_type=jnp.float32)
    o_ref[...] = acc.astype(o_ref.dtype)
    sum_ref[...] = jnp.sum(acc, axis=0, keepdims=True)[None]
    sq_ref[...] = jnp.sum(acc * acc, axis=0, keepdims=True)[None]


def _pick_tm(Mp, K, N):
    """Largest M tile (multiple of 8, divisor of Mp) within a ~28 MiB budget."""
    budget = 28 << 20
    cap = min(Mp, 2048)
    tm = 8
    for t in range(cap, 7, -8):
        if Mp % t == 0 and (4 * K * N + t * (4 * K + 8 * N)) <= budget:
            tm = t
            break
    # give both v7x TensorCores work even for small M
    if Mp // tm == 1 and Mp >= 16 and (Mp // 2) % 8 == 0:
        tm = Mp // 2
    return tm


@functools.lru_cache(maxsize=None)
def _make_matmul(M, K, N, out_dtype_name, prebn):
    out_dtype = jnp.dtype(out_dtype_name)
    Mp = _round_up(max(M, 8), 8)
    tm = _pick_tm(Mp, K, N)
    gi = Mp // tm
    # TODO(synk): mark the resident-B spec pipeline_mode=pl.Buffered(1) once
    # single-buffering is safe everywhere (extra VMEM headroom on v7x).
    if prebn:
        kern = functools.partial(_mm_prebn_kernel, tm=tm, m_valid=M,
                                 mask=(Mp != M))
        in_specs = [pl.BlockSpec((tm, K), lambda i: (i, 0)),
                    pl.BlockSpec((1, K), lambda i: (0, 0)),
                    pl.BlockSpec((1, K), lambda i: (0, 0)),
                    pl.BlockSpec((K, N), lambda i: (0, 0))]
    else:
        kern = _mm_plain_kernel
        in_specs = [pl.BlockSpec((tm, K), lambda i: (i, 0)),
                    pl.BlockSpec((K, N), lambda i: (0, 0))]
    fn = pl.pallas_call(
        kern,
        out_shape=(jax.ShapeDtypeStruct((Mp, N), out_dtype),
                   jax.ShapeDtypeStruct((gi, 1, N), jnp.float32),
                   jax.ShapeDtypeStruct((gi, 1, N), jnp.float32)),
        grid=(gi,),
        in_specs=in_specs,
        out_specs=(pl.BlockSpec((tm, N), lambda i: (i, 0)),
                   pl.BlockSpec((1, 1, N), lambda i: (i, 0, 0)),
                   pl.BlockSpec((1, 1, N), lambda i: (i, 0, 0))),
        compiler_params=pltpu.CompilerParams(
            dimension_semantics=("parallel",),
            vmem_limit_bytes=_VMEM_LIMIT),
    )
    return jax.jit(fn), Mp, gi


def pallas_matmul(a, b, out_dtype=jnp.bfloat16):
    """a:(M,K), b:(K,N) -> (out, col_sum, col_sq).  bf16 operands, f32 acc."""
    M, K = a.shape
    N = b.shape[1]
    fn, Mp, gi = _make_matmul(M, K, N, jnp.dtype(out_dtype).name, False)
    a = a.astype(jnp.bfloat16)
    if Mp != M:
        a = jnp.pad(a, ((0, Mp - M), (0, 0)))      # zero rows -> stats unaffected
    out, s, q = fn(a, b.astype(jnp.bfloat16))
    if Mp != M:
        out = out[:M]
    return (out,
            s.reshape(gi, N).sum(axis=0, keepdims=True),
            q.reshape(gi, N).sum(axis=0, keepdims=True))


def pallas_matmul_prebn(a_raw, scale, shift, b):
    """Same as pallas_matmul but A := relu(A*scale + shift) is applied in-kernel."""
    M, K = a_raw.shape
    N = b.shape[1]
    fn, Mp, gi = _make_matmul(M, K, N, "bfloat16", True)
    a = a_raw.astype(jnp.bfloat16)
    if Mp != M:
        a = jnp.pad(a, ((0, Mp - M), (0, 0)))
    out, s, q = fn(a, scale, shift, b.astype(jnp.bfloat16))
    if Mp != M:
        out = out[:M]
    return (out,
            s.reshape(gi, N).sum(axis=0, keepdims=True),
            q.reshape(gi, N).sum(axis=0, keepdims=True))


# ----------------------------------------------------------------------------
# Fused 3x3 stride-1 conv: per-image slab, previous BN+ReLU applied in-kernel,
# zero padding done in a VMEM scratch, 9 taps accumulated on the MXU,
# per-channel stats emitted for this layer's BatchNorm.
# ----------------------------------------------------------------------------
def _conv3x3_kernel(x_ref, s_ref, t_ref, w_ref, o_ref, sum_ref, sq_ref,
                    pad_ref):
    _, H, W, C = x_ref.shape
    Cout = w_ref.shape[2]
    x = x_ref[0].astype(jnp.float32)                         # (H, W, C)
    s = s_ref[...].reshape(1, 1, C)
    t = t_ref[...].reshape(1, 1, C)
    y = jnp.maximum(x * s + t, 0.0).astype(jnp.bfloat16)     # prev BN + ReLU
    # zero-pad in post-activation space (border must be 0 after BN+ReLU)
    pad_ref[...] = jnp.zeros(pad_ref.shape, pad_ref.dtype)
    pad_ref[1:H + 1, 1:W + 1, :] = y
    acc = jnp.zeros((H * W, Cout), jnp.float32)
    for di in range(3):
        for dj in range(3):
            a = pad_ref[di:di + H, dj:dj + W, :].reshape(H * W, C)
            acc = acc + jnp.dot(a, w_ref[di * 3 + dj],
                                preferred_element_type=jnp.float32)
    o_ref[...] = acc.reshape(1, H, W, Cout).astype(o_ref.dtype)
    sum_ref[...] = jnp.sum(acc, axis=0, keepdims=True)[None]
    sq_ref[...] = jnp.sum(acc * acc, axis=0, keepdims=True)[None]


@functools.lru_cache(maxsize=None)
def _make_conv3x3(N, H, W, C, Cout):
    fn = pl.pallas_call(
        _conv3x3_kernel,
        out_shape=(jax.ShapeDtypeStruct((N, H, W, Cout), jnp.bfloat16),
                   jax.ShapeDtypeStruct((N, 1, Cout), jnp.float32),
                   jax.ShapeDtypeStruct((N, 1, Cout), jnp.float32)),
        grid=(N,),
        in_specs=[pl.BlockSpec((1, H, W, C), lambda n: (n, 0, 0, 0)),
                  pl.BlockSpec((1, C), lambda n: (0, 0)),
                  pl.BlockSpec((1, C), lambda n: (0, 0)),
                  pl.BlockSpec((9, C, Cout), lambda n: (0, 0, 0))],
        out_specs=(pl.BlockSpec((1, H, W, Cout), lambda n: (n, 0, 0, 0)),
                   pl.BlockSpec((1, 1, Cout), lambda n: (n, 0, 0)),
                   pl.BlockSpec((1, 1, Cout), lambda n: (n, 0, 0))),
        scratch_shapes=[pltpu.VMEM((H + 2, W + 2, C), jnp.bfloat16)],
        compiler_params=pltpu.CompilerParams(
            dimension_semantics=("parallel",),
            vmem_limit_bytes=_VMEM_LIMIT),
    )
    return jax.jit(fn)


def conv3x3_fused(x4d_raw, scale, shift, w9):
    """x4d_raw: raw (pre-BN) conv output (N,H,W,C); w9: (9,C,Cout) bf16."""
    N, H, W, C = x4d_raw.shape
    Cout = w9.shape[2]
    fn = _make_conv3x3(N, H, W, C, Cout)
    out, s, q = fn(x4d_raw.astype(jnp.bfloat16), scale, shift, w9)
    return (out,
            s.reshape(N, Cout).sum(axis=0, keepdims=True),
            q.reshape(N, Cout).sum(axis=0, keepdims=True))


# ----------------------------------------------------------------------------
# Elementwise BN apply kernels (bf16 out, f32 math).
#   relu   : y = relu(x*s + t)                      (conv1 / stride-2 fallback)
#   res    : y = relu(x*s + t + r)                  (block final, identity res)
#   res_bn : y = relu(x*s + t + r*sd + td)          (block final, downsample res)
# ----------------------------------------------------------------------------
def _bn_relu_kernel(x_ref, s_ref, t_ref, o_ref):
    y = x_ref[...].astype(jnp.float32) * s_ref[...] + t_ref[...]
    o_ref[...] = jnp.maximum(y, 0.0).astype(o_ref.dtype)


def _bn_res_kernel(x_ref, s_ref, t_ref, r_ref, o_ref):
    y = (x_ref[...].astype(jnp.float32) * s_ref[...] + t_ref[...]
         + r_ref[...].astype(jnp.float32))
    o_ref[...] = jnp.maximum(y, 0.0).astype(o_ref.dtype)


def _bn_res_bn_kernel(x_ref, s_ref, t_ref, r_ref, sd_ref, td_ref, o_ref):
    y = (x_ref[...].astype(jnp.float32) * s_ref[...] + t_ref[...]
         + r_ref[...].astype(jnp.float32) * sd_ref[...] + td_ref[...])
    o_ref[...] = jnp.maximum(y, 0.0).astype(o_ref.dtype)


_BN_KERNELS = {"relu": _bn_relu_kernel, "res": _bn_res_kernel,
               "res_bn": _bn_res_bn_kernel}


@functools.lru_cache(maxsize=None)
def _make_bn(M, C, mode):
    Mp = _round_up(max(M, 8), 8)
    tm = 8
    for t in range(min(Mp, 8192), 7, -8):
        if Mp % t == 0 and t * C <= (1 << 20):     # ~2 MB bf16 blocks
            tm = t
            break
    in_specs = [pl.BlockSpec((tm, C), lambda i: (i, 0)),
                pl.BlockSpec((1, C), lambda i: (0, 0)),
                pl.BlockSpec((1, C), lambda i: (0, 0))]
    if mode == "res":
        in_specs.append(pl.BlockSpec((tm, C), lambda i: (i, 0)))
    elif mode == "res_bn":
        in_specs += [pl.BlockSpec((tm, C), lambda i: (i, 0)),
                     pl.BlockSpec((1, C), lambda i: (0, 0)),
                     pl.BlockSpec((1, C), lambda i: (0, 0))]
    fn = pl.pallas_call(
        _BN_KERNELS[mode],
        out_shape=jax.ShapeDtypeStruct((Mp, C), jnp.bfloat16),
        grid=(Mp // tm,),
        in_specs=in_specs,
        out_specs=pl.BlockSpec((tm, C), lambda i: (i, 0)),
        compiler_params=pltpu.CompilerParams(
            dimension_semantics=("parallel",),
            vmem_limit_bytes=_VMEM_LIMIT),
    )
    return jax.jit(fn), Mp


def bn_apply(x2d, scale, shift, mode="relu", residual=None,
             res_scale=None, res_shift=None):
    M, C = x2d.shape
    if mode == "relu" and C == 64 and M % 2 == 0:
        # lane-dense presentation for narrow-channel tensors (avoids vst.msk)
        y = bn_apply(x2d.reshape(M // 2, 128), jnp.tile(scale, (1, 2)),
                     jnp.tile(shift, (1, 2)), mode="relu")
        return y.reshape(M, C)
    fn, Mp = _make_bn(M, C, mode)
    pads = Mp != M

    def pad(z):
        return jnp.pad(z, ((0, Mp - M), (0, 0))) if pads else z

    args = [pad(x2d), scale, shift]
    if mode == "res":
        args.append(pad(residual))
    elif mode == "res_bn":
        args += [pad(residual), res_scale, res_shift]
    y = fn(*args)
    return y[:M] if pads else y


# ----------------------------------------------------------------------------
# MaxPool 3x3 stride 2 pad 1 (post-activation input => 0-padding is exact)
# and global average pool (grid over batch).
# ----------------------------------------------------------------------------
def _maxpool_kernel(x_ref, o_ref):
    o_ref[...] = jnp.max(x_ref[...].astype(jnp.float32),
                         axis=0).astype(o_ref.dtype)


@functools.lru_cache(maxsize=None)
def _make_maxpool(M, C):
    Mp = _round_up(max(M, 8), 8)
    tm = 8
    for t in range(min(Mp, 4096), 7, -8):
        if Mp % t == 0 and 9 * t * C <= (1 << 21):
            tm = t
            break
    fn = pl.pallas_call(
        _maxpool_kernel,
        out_shape=jax.ShapeDtypeStruct((Mp, C), jnp.bfloat16),
        grid=(Mp // tm,),
        in_specs=[pl.BlockSpec((9, tm, C), lambda i: (0, i, 0))],
        out_specs=pl.BlockSpec((tm, C), lambda i: (i, 0)),
        compiler_params=pltpu.CompilerParams(
            dimension_semantics=("parallel",),
            vmem_limit_bytes=_VMEM_LIMIT),
    )
    return jax.jit(fn), Mp


def maxpool_3x3_s2_p1(x):
    # TODO(synk): read the 9 taps from a padded VMEM slab in-kernel (needs
    # stride-2 in-kernel slicing) instead of materializing the tap stack.
    N, H, W, C = x.shape
    k, s, p = 3, 2, 1
    Ho = (H + 2 * p - k) // s + 1
    Wo = (W + 2 * p - k) // s + 1
    xp = jnp.pad(x, ((0, 0), (p, p), (p, p), (0, 0)))   # post-ReLU => 0 pad exact
    slices = [xp[:, i:i + s * (Ho - 1) + 1:s, j:j + s * (Wo - 1) + 1:s, :]
              for i in range(k) for j in range(k)]
    M = N * Ho * Wo
    st = jnp.stack(slices, axis=0).reshape(k * k, M, C)
    Md, Cd = M, C
    if C == 64 and M % 2 == 0:                          # lane-dense
        st = st.reshape(k * k, M // 2, 128)
        Md, Cd = M // 2, 128
    fn, Mp = _make_maxpool(Md, Cd)
    if Mp != Md:
        st = jnp.pad(st, ((0, 0), (0, Mp - Md), (0, 0)))
    out = fn(st)
    if Mp != Md:
        out = out[:Md]
    return out.reshape(N, Ho, Wo, C)


def _avgpool_kernel(x_ref, o_ref):
    x = x_ref[...].astype(jnp.float32)
    o_ref[...] = jnp.sum(x, axis=1, keepdims=True) * (1.0 / x_ref.shape[1])


@functools.lru_cache(maxsize=None)
def _make_avgpool(N, HW, C):
    fn = pl.pallas_call(
        _avgpool_kernel,
        out_shape=jax.ShapeDtypeStruct((N, 1, C), jnp.float32),
        grid=(N,),
        in_specs=[pl.BlockSpec((1, HW, C), lambda n: (n, 0, 0))],
        out_specs=pl.BlockSpec((1, 1, C), lambda n: (n, 0, 0)),
        compiler_params=pltpu.CompilerParams(
            dimension_semantics=("parallel",),
            vmem_limit_bytes=_VMEM_LIMIT),
    )
    return jax.jit(fn)


# ----------------------------------------------------------------------------
# im2col glue (used only for conv1 7x7 and the three stride-2 3x3 convs).
# ----------------------------------------------------------------------------
def _im2col(x, kh, kw, stride, pad):
    N, H, W, C = x.shape
    Ho = (H + 2 * pad - kh) // stride + 1
    Wo = (W + 2 * pad - kw) // stride + 1
    if kh == 1 and kw == 1 and pad == 0:
        xs = x if stride == 1 else x[:, ::stride, ::stride, :]
        return xs.reshape(N * Ho * Wo, C), Ho, Wo
    # TODO(synk): fold stride-2 3x3 taps into the slab conv kernel as well
    # (needs strided in-kernel slicing); only 3 blocks use this path.
    xp = jnp.pad(x, ((0, 0), (pad, pad), (pad, pad), (0, 0))) if pad else x
    patches = [xp[:, i:i + stride * (Ho - 1) + 1:stride,
                  j:j + stride * (Wo - 1) + 1:stride, :]
               for i in range(kh) for j in range(kw)]
    a = jnp.concatenate(patches, axis=-1).reshape(N * Ho * Wo, kh * kw * C)
    return a, Ho, Wo


def _bn_coeffs(col_sum, col_sq, m, gamma, beta):
    mean = col_sum / m
    var = jnp.maximum(col_sq / m - mean * mean, 0.0)
    scale = gamma * lax.rsqrt(var + _BN_EPS)
    shift = beta - mean * scale
    return scale, shift


# ----------------------------------------------------------------------------
# ResNet101 (torchvision config: Bottleneck, layers = [3, 4, 23, 3])
# ----------------------------------------------------------------------------
def bottleneck(x, p):
    N, H, W, Cin = x.shape
    s = p["stride"]
    width = p["w1"].shape[1]
    Cout = p["w3"].shape[1]

    # conv1 1x1 (input is already post-activation)
    M = N * H * W
    z1, c1s, c1q = pallas_matmul(x.reshape(M, Cin), p["w1"])
    sc1, sh1 = _bn_coeffs(c1s, c1q, M, p["g1"], p["b1"])

    # conv2 3x3 (BN1+ReLU fused into the conv's A path)
    if s == 1:
        z2_4d, c2s, c2q = conv3x3_fused(z1.reshape(N, H, W, width),
                                        sc1, sh1, p["w2"])
        Ho, Wo = H, W
    else:
        act1 = bn_apply(z1, sc1, sh1, mode="relu").reshape(N, H, W, width)
        a2, Ho, Wo = _im2col(act1, 3, 3, s, 1)
        z2, c2s, c2q = pallas_matmul(a2, p["w2"].reshape(9 * width, width))
        z2_4d = z2.reshape(N, Ho, Wo, width)
    M2 = N * Ho * Wo
    sc2, sh2 = _bn_coeffs(c2s, c2q, M2, p["g2"], p["b2"])

    # conv3 1x1 with BN2+ReLU fused into the A operand
    z3, c3s, c3q = pallas_matmul_prebn(z2_4d.reshape(M2, width), sc2, sh2,
                                       p["w3"])
    sc3, sh3 = _bn_coeffs(c3s, c3q, M2, p["g3"], p["b3"])

    # identity / downsample path + final BN + residual + ReLU
    if p["down"]:
        xs = x if s == 1 else x[:, ::s, ::s, :]
        zd, cds, cdq = pallas_matmul(xs.reshape(M2, Cin), p["wd"])
        scd, shd = _bn_coeffs(cds, cdq, M2, p["gd"], p["bd"])
        y = bn_apply(z3, sc3, sh3, mode="res_bn", residual=zd,
                     res_scale=scd, res_shift=shd)
    else:
        y = bn_apply(z3, sc3, sh3, mode="res", residual=x.reshape(M2, Cout))
    return y.reshape(N, Ho, Wo, Cout)


def build_params(key):
    cnt = [0]

    def nkey():
        cnt[0] += 1
        return jax.random.fold_in(key, cnt[0])

    def conv1x1(cin, cout):
        std = (2.0 / cin) ** 0.5
        return (jax.random.normal(nkey(), (cin, cout), jnp.float32)
                * std).astype(jnp.bfloat16)

    def conv3x3(cin, cout):
        std = (2.0 / (cin * 9)) ** 0.5
        return (jax.random.normal(nkey(), (9, cin, cout), jnp.float32)
                * std).astype(jnp.bfloat16)

    def bn_p(c):
        return jnp.ones((1, c), jnp.float32), jnp.zeros((1, c), jnp.float32)

    params = {}
    std = (2.0 / 147) ** 0.5
    params["conv1"] = (jax.random.normal(nkey(), (147, 64), jnp.float32)
                       * std).astype(jnp.bfloat16)   # (7*7*3, 64), tap-major rows
    params["bn1_g"], params["bn1_b"] = bn_p(64)

    cfg = [(64, 3, 1), (128, 4, 2), (256, 23, 2), (512, 3, 2)]   # resnet101
    in_ch = 64
    layers = []
    for width, nblocks, stride in cfg:
        blocks = []
        for b in range(nblocks):
            s = stride if b == 0 else 1
            p = {"stride": s, "down": b == 0}
            p["w1"] = conv1x1(in_ch, width)
            p["g1"], p["b1"] = bn_p(width)
            p["w2"] = conv3x3(width, width)
            p["g2"], p["b2"] = bn_p(width)
            p["w3"] = conv1x1(width, width * 4)
            p["g3"], p["b3"] = bn_p(width * 4)
            if p["down"]:
                p["wd"] = conv1x1(in_ch, width * 4)
                p["gd"], p["bd"] = bn_p(width * 4)
            blocks.append(p)
            in_ch = width * 4
        layers.append(blocks)
    params["layers"] = layers

    params["fc_w"] = (jax.random.normal(nkey(), (2048, 1000), jnp.float32)
                      * (1.0 / 2048) ** 0.5).astype(jnp.bfloat16)
    params["fc_b"] = jnp.zeros((1000,), jnp.float32)
    return params


def resnet101_forward(params, x_nchw):
    # PyTorch NCHW f32 -> NHWC; inter-layer activations are carried in bf16.
    x = jnp.transpose(x_nchw, (0, 2, 3, 1)).astype(jnp.bfloat16)
    N = x.shape[0]

    # conv1 7x7/2 (im2col path; K=147 full-extent tile) + BN + ReLU
    a, Ho, Wo = _im2col(x, 7, 7, 2, 3)
    M0 = N * Ho * Wo
    z0, c0s, c0q = pallas_matmul(a, params["conv1"])
    sc0, sh0 = _bn_coeffs(c0s, c0q, M0, params["bn1_g"], params["bn1_b"])
    act0 = bn_apply(z0, sc0, sh0, mode="relu").reshape(N, Ho, Wo, 64)

    x = maxpool_3x3_s2_p1(act0)
    for blocks in params["layers"]:
        for p in blocks:
            x = bottleneck(x, p)

    Nb, H, W, C = x.shape
    feat = _make_avgpool(Nb, H * W, C)(x.reshape(Nb, H * W, C)).reshape(Nb, C)
    logits, _, _ = pallas_matmul(feat.astype(jnp.bfloat16), params["fc_w"],
                                 out_dtype=jnp.float32)
    return logits + params["fc_b"]


if __name__ == "__main__":
    key = jax.random.PRNGKey(0)
    # Small but structurally faithful input: 3 channels (required by conv1),
    # 32x32 spatial so every stage (stride-2 convs, maxpool, avgpool) runs.
    x = jax.random.normal(key, (2, 3, 32, 32), jnp.float32)   # NCHW, like PyTorch
    params = build_params(jax.random.PRNGKey(1))
    logits = resnet101_forward(params, x)
    logits = jax.block_until_ready(logits)
    assert logits.shape == (2, 1000) and logits.dtype == jnp.float32
    print("KERNEL_OK")
</pallas_src>

<mosaic_0001>
module attributes {stable_mosaic.version = 11 : i64} {
  func.func @_mm_plain_kernel(%arg0: i32, %arg1: memref<256x147xbf16, #tpu.memory_space<vmem>>, %arg2: memref<147x64xbf16, #tpu.memory_space<vmem>>, %arg3: memref<256x64xbf16, #tpu.memory_space<vmem>>, %arg4: memref<1x1x64xf32, #tpu.memory_space<vmem>>, %arg5: memref<1x1x64xf32, #tpu.memory_space<vmem>>) attributes {dimension_semantics = [#tpu.dimension_semantics<parallel>], iteration_bounds = array<i64: 2>, scalar_prefetch = 0 : i64, scratch_operands = 0 : i64, tpu.core_type = #tpu.core_type<tc>, window_params = [{transform_indices = @transform_0, window_bounds = array<i64: 256, 147>}, {pipeline_mode = #tpu.pipeline_mode<synchronous>, transform_indices = @transform_1, window_bounds = array<i64: 147, 64>}, {transform_indices = @transform_2, window_bounds = array<i64: 256, 64>}, {transform_indices = @transform_3, window_bounds = array<i64: 1, 1, 64>}, {transform_indices = @transform_4, window_bounds = array<i64: 1, 1, 64>}]} {
    %c0 = arith.constant 0 : index
    %c0_0 = arith.constant 0 : index
    %0 = vector.load %arg1[%c0, %c0_0] : memref<256x147xbf16, #tpu.memory_space<vmem>>, vector<256x147xbf16>
    %c0_1 = arith.constant 0 : index
    %c0_2 = arith.constant 0 : index
    %1 = vector.load %arg2[%c0_1, %c0_2] : memref<147x64xbf16, #tpu.memory_space<vmem>>, vector<147x64xbf16>
    %cst = arith.constant dense<0.000000e+00> : vector<256x64xf32>
    %2 = tpu.matmul %0, %1, %cst {dimension_numbers = #tpu.dot_dimension_numbers<[1], [0], [0], [1], [0, 0, 1, 1], [], []>} : vector<256x147xbf16>, vector<147x64xbf16>, vector<256x64xf32> -> vector<256x64xf32>
    %3 = arith.truncf %2 : vector<256x64xf32> to vector<256x64xbf16>
    %c0_3 = arith.constant 0 : index
    %c0_4 = arith.constant 0 : index
    %4 = vector.load %arg3[%c0_3, %c0_4] : memref<256x64xbf16, #tpu.memory_space<vmem>>, vector<256x64xbf16>
    tpu.vector_store %arg3[%c0_3, %c0_4], %3 {strides = array<i32>} : memref<256x64xbf16, #tpu.memory_space<vmem>>, vector<256x64xbf16>,
    %cst_5 = arith.constant dense<0.000000e+00> : vector<64xf32>
    %5 = vector.multi_reduction <add>, %2, %cst_5 [0] : vector<256x64xf32> to vector<64xf32>
    %6 = vector.shape_cast %5 : vector<64xf32> to vector<1x64xf32>
    %7 = vector.shape_cast %6 : vector<1x64xf32> to vector<1x1x64xf32>
    %c0_6 = arith.constant 0 : index
    %c0_7 = arith.constant 0 : index
    %c0_8 = arith.constant 0 : index
    %8 = vector.load %arg4[%c0_6, %c0_7, %c0_8] : memref<1x1x64xf32, #tpu.memory_space<vmem>>, vector<1x1x64xf32>
    tpu.vector_store %arg4[%c0_6, %c0_7, %c0_8], %7 {strides = array<i32>} : memref<1x1x64xf32, #tpu.memory_space<vmem>>, vector<1x1x64xf32>,
    %9 = arith.mulf %2, %2 : vector<256x64xf32>
    %cst_9 = arith.constant dense<0.000000e+00> : vector<64xf32>
    %10 = vector.multi_reduction <add>, %9, %cst_9 [0] : vector<256x64xf32> to vector<64xf32>
    %11 = vector.shape_cast %10 : vector<64xf32> to vector<1x64xf32>
    %12 = vector.shape_cast %11 : vector<1x64xf32> to vector<1x1x64xf32>
    %c0_10 = arith.constant 0 : index
    %c0_11 = arith.constant 0 : index
    %c0_12 = arith.constant 0 : index
    %13 = vector.load %arg5[%c0_10, %c0_11, %c0_12] : memref<1x1x64xf32, #tpu.memory_space<vmem>>, vector<1x1x64xf32>
    tpu.vector_store %arg5[%c0_10, %c0_11, %c0_12], %12 {strides = array<i32>} : memref<1x1x64xf32, #tpu.memory_space<vmem>>, vector<1x1x64xf32>,
    return
  }
  func.func @transform_0(%arg0: i32) -> (i32, i32) {
    %c0_i32 = arith.constant 0 : i32
    %c0_i32_0 = arith.constant 0 : i32
    return %arg0, %c0_i32 : i32, i32
  }
  func.func @transform_1(%arg0: i32) -> (i32, i32) {
    %c0_i32 = arith.constant 0 : i32
    %c0_i32_0 = arith.constant 0 : i32
    %c0_i32_1 = arith.constant 0 : i32
    return %c0_i32, %c0_i32_0 : i32, i32
  }
  func.func @transform_2(%arg0: i32) -> (i32, i32) {
    %c0_i32 = arith.constant 0 : i32
    %c0_i32_0 = arith.constant 0 : i32
    return %arg0, %c0_i32 : i32, i32
  }
  func.func @transform_3(%arg0: i32) -> (i32, i32, i32) {
    %c0_i32 = arith.constant 0 : i32
    %c0_i32_0 = arith.constant 0 : i32
    %c0_i32_1 = arith.constant 0 : i32
    return %arg0, %c0_i32, %c0_i32_0 : i32, i32, i32
  }
  func.func @transform_4(%arg0: i32) -> (i32, i32, i32) {
    %c0_i32 = arith.constant 0 : i32
    %c0_i32_0 = arith.constant 0 : i32
    %c0_i32_1 = arith.constant 0 : i32
    return %arg0, %c0_i32, %c0_i32_0 : i32, i32, i32
  }
}

</mosaic_0001>

<llo_original>
// kernel: tpu_custom_call.1
$region0: #{tpu_custom_call.1}
  #allocation0 [shape = 'u32[]', space=smem, size = 0x4, offset = 0x4, fixed_abs, tag = 'smem constant byte address 0x4 - core index']
  #allocation1 [shape = 'u32[144,128]{1,0:T(1,128)}', space=vmem, size = 0x12000, scoped, tag = 'internal scratch']
  %s0 = inlined_call_operand.vmem [shape: bf16[512,147], index: 0, kind: input, shape index: {}]
  %s1 = inlined_call_operand.vmem [shape: bf16[147,64], index: 1, kind: input, shape index: {}]
  %s2 = inlined_call_operand.vmem [shape: bf16[512,64], index: 2, kind: output, shape index: {0}]
  %s3 = inlined_call_operand.hbm [shape: f32[2,1,64], index: 3, kind: output, shape index: {1}]
  %s4 = inlined_call_operand.hbm [shape: f32[2,1,64], index: 4, kind: output, shape index: {2}]
  %5 = xla_tuple %s2, %s3, %s4
  %s6 = sld [smem:[#allocation0]]
  $region57: #{tpu_custom_call.1} parent=0
    _
  %s8 = ssub.s32 1, %s6
  %s9 = scalar_select 0, %s8, %s6
  $region1: #{tpu_custom_call.1} parent=0
    #allocation2 [shape = 'u8[1024]{0}', space=vmem, size = 0x400, scoped, tag = 'output window, operand 1']
    #allocation3 [shape = 's32[2]{0}', space=sflag, size = 0x8, scoped, tag = 'scoped memory for tpu_custom_call.1']
    #allocation4 [shape = 'u8[1024]{0}', space=vmem, size = 0x400, scoped, tag = 'output window, operand 2']
    #allocation5 [shape = 's32[2]{0}', space=sflag, size = 0x8, scoped, tag = 'scoped memory for tpu_custom_call.1']
    %10 = vsyncpa [#allocation3], 0
    %s11 = scalar_lea.sflag [#allocation3], 1
    %12 = vsyncpa %s11, 0
    %13 = vsyncpa [#allocation5], 0
    %s14 = scalar_lea.sflag [#allocation5], 1
    %15 = vsyncpa %s14, 0
    loop: start=0, step=1, limit=4
    $region2: #{tpu_custom_call.1} parent=1 // loop_pre_header
      _
    $region3: #{tpu_custom_call.1} parent=1 // loop_header
      %s17 = sphi 0, %s21
      %p18 = scmp.ge.s32.totalorder %s17, 4
      %s27 = sphi 0, %s29
      %s30 = sphi 0, %s27
      %s31 = sphi 0, %s30
      %s47 = sphi 0, %s31
      %s51 = sphi 0, %s51
      %s53 = sphi 0, %s51
      %s54 = sphi 0, %s53
      %s68 = sphi 0, %s54
      %s74 = sphi 0, %s76
      %s77 = sphi 0, %s74
      %s78 = sphi 0, %s77
      %s94 = sphi 0, %s78
      %s100 = sphi 0, %s102
      %s103 = sphi 0, %s100
      %s104 = sphi 0, %s103
      %s120 = sphi 0, %s104
      %s126 = sphi 0, %s128
      %s129 = sphi 0, %s126
      %s130 = sphi 0, %s129
      %s146 = sphi 0, %s130
    $region4: #{tpu_custom_call.1} parent=1 // loop_header_branch
      %20 = sbr.rel (%p18) target = $region8
    $region5: #{tpu_custom_call.1} parent=1 // loop_body
      %s22 = ssub.s32 %s17, 1
      %s23 = ssub.s32 %s17, 2
      %s24 = sadd.s32 %s17, 1
      %s25 = ssub.s32 %s17, %s24
      %p26 = scmp.eq.s32.totalorder %s25, 0
      %s28 = sadd.s32 %s27, 1
      %s29 = scalar_select %p26, %s27, %s28
      %p32 = pneg %p26
      %p33 = scmp.eq.s32.totalorder %s17, 1
      %p34 = por %p32, %p33
      %p35 = scmp.ne.s32.totalorder %s27, %s30
      %p36 = scmp.eq.s32.totalorder %s17, 0
      %p37 = por %p35, %p36
      %p38 = scmp.ne.s32.totalorder %s27, %s30
      %p39 = scmp.eq.s32.totalorder %s22, 1
      %p40 = por %p38, %p39
      %p41 = scmp.ne.s32.totalorder %s30, %s31
      %p42 = scmp.eq.s32.totalorder %s22, 0
      %p43 = por %p41, %p42
      %p44 = scmp.ne.s32.totalorder %s30, %s31
      %p45 = scmp.eq.s32.totalorder %s23, 1
      %p46 = por %p44, %p45
      %p48 = scmp.ne.s32.totalorder %s31, %s47
      %p49 = scmp.eq.s32.totalorder %s23, 0
      %p50 = por %p48, %p49
      %s52 = sadd.s32 %s51, 1
      %p55 = scmp.eq.s32.totalorder %s17, 1
      %p56 = scmp.ne.s32.totalorder %s51, %s53
      %p57 = scmp.eq.s32.totalorder %s17, 0
      %p58 = por %p56, %p57
      %p59 = scmp.ne.s32.totalorder %s51, %s53
      %p60 = scmp.eq.s32.totalorder %s22, 1
      %p61 = por %p59, %p60
      %p62 = scmp.ne.s32.totalorder %s53, %s54
      %p63 = scmp.eq.s32.totalorder %s22, 0
      %p64 = por %p62, %p63
      %p65 = scmp.ne.s32.totalorder %s53, %s54
      %p66 = scmp.eq.s32.totalorder %s23, 1
      %p67 = por %p65, %p66
      %p69 = scmp.ne.s32.totalorder %s54, %s68
      %p70 = scmp.eq.s32.totalorder %s23, 0
      %p71 = por %p69, %p70
      %s72 = ssub.s32 %s17, %s24
      %p73 = scmp.eq.s32.totalorder %s72, 0
      %s75 = sadd.s32 %s74, 1
      %s76 = scalar_select %p73, %s74, %s75
      %p79 = pneg %p73
      %p80 = scmp.eq.s32.totalorder %s17, 1
      %p81 = por %p79, %p80
      %p82 = scmp.ne.s32.totalorder %s74, %s77
      %p83 = scmp.eq.s32.totalorder %s17, 0
      %p84 = por %p82, %p83
      %p85 = scmp.ne.s32.totalorder %s74, %s77
      %p86 = scmp.eq.s32.totalorder %s22, 1
      %p87 = por %p85, %p86
      %p88 = scmp.ne.s32.totalorder %s77, %s78
      %p89 = scmp.eq.s32.totalorder %s22, 0
      %p90 = por %p88, %p89
      %p91 = scmp.ne.s32.totalorder %s77, %s78
      %p92 = scmp.eq.s32.totalorder %s23, 1
      %p93 = por %p91, %p92
      %p95 = scmp.ne.s32.totalorder %s78, %s94
      %p96 = scmp.eq.s32.totalorder %s23, 0
      %p97 = por %p95, %p96
      %s98 = ssub.s32 %s17, %s24
      %p99 = scmp.eq.s32.totalorder %s98, 0
      %s101 = sadd.s32 %s100, 1
      %s102 = scalar_select %p99, %s100, %s101
      %p105 = pneg %p99
      %p106 = scmp.eq.s32.totalorder %s17, 1
      %p107 = por %p105, %p106
      %p108 = scmp.ne.s32.totalorder %s100, %s103
      %p109 = scmp.eq.s32.totalorder %s17, 0
      %p110 = por %p108, %p109
      %p111 = scmp.ne.s32.totalorder %s100, %s103
      %p112 = scmp.eq.s32.totalorder %s22, 1
      %p113 = por %p111, %p112
      %p114 = scmp.ne.s32.totalorder %s103, %s104
      %p115 = scmp.eq.s32.totalorder %s22, 0
      %p116 = por %p114, %p115
      %p117 = scmp.ne.s32.totalorder %s103, %s104
      %p118 = scmp.eq.s32.totalorder %s23, 1
      %p119 = por %p117, %p118
      %p121 = scmp.ne.s32.totalorder %s104, %s120
      %p122 = scmp.eq.s32.totalorder %s23, 0
      %p123 = por %p121, %p122
      %s124 = ssub.s32 %s17, %s24
      %p125 = scmp.eq.s32.totalorder %s124, 0
      %s127 = sadd.s32 %s126, 1
      %s128 = scalar_select %p125, %s126, %s127
      %p131 = pneg %p125
      %p132 = scmp.eq.s32.totalorder %s17, 1
      %p133 = por %p131, %p132
      %p134 = scmp.ne.s32.totalorder %s126, %s129
      %p135 = scmp.eq.s32.totalorder %s17, 0
      %p136 = por %p134, %p135
      %p137 = scmp.ne.s32.totalorder %s126, %s129
      %p138 = scmp.eq.s32.totalorder %s22, 1
      %p139 = por %p137, %p138
      %p140 = scmp.ne.s32.totalorder %s129, %s130
      %p141 = scmp.eq.s32.totalorder %s22, 0
      %p142 = por %p140, %p141
      %p143 = scmp.ne.s32.totalorder %s129, %s130
      %p144 = scmp.eq.s32.totalorder %s23, 1
      %p145 = por %p143, %p144
      %p147 = scmp.ne.s32.totalorder %s130, %s146
      %p148 = scmp.eq.s32.totalorder %s23, 0
      %p149 = por %p147, %p148
      %p150 = scmp.le.s32.totalorder 1, %s17
      %p151 = scmp.lt.s32.totalorder %s17, 3
      %p152 = pnand %p150, %p151
      %p153 = pneg %p152
      // Predicated region
      $region9: #{tpu_custom_call.1} parent=5 // pred_check
        _
      $region10: #{tpu_custom_call.1} parent=5 // pred_check_branch
        %155 = sbr.rel (%p152) target = $region12
      $region11: #{tpu_custom_call.1} parent=5 // pred_region
        %s156 = ssub.s32 %s17, 1
        // Predicated region
        $region13: #{tpu_custom_call.1} parent=11 // pred_check
          %p157 = pneg %p64
        $region14: #{tpu_custom_call.1} parent=11 // pred_check_branch
          %159 = sbr.rel (%p157) target = $region16
        $region15: #{tpu_custom_call.1} parent=11 // pred_region
          _
        $region16: #{tpu_custom_call.1} parent=11 // pred_fallthru
          _
      $region12: #{tpu_custom_call.1} parent=5 // pred_fallthru
        _
      %p160 = scmp.lt.s32.totalorder %s17, 2
      // Predicated region
      $region17: #{tpu_custom_call.1} parent=5 // pred_check
        %p161 = pneg %p160
      $region18: #{tpu_custom_call.1} parent=5 // pred_check_branch
        %163 = sbr.rel (%p161) target = $region20
      $region19: #{tpu_custom_call.1} parent=5 // pred_region
        // Predicated region
        $region21: #{tpu_custom_call.1} parent=19 // pred_check
          %p164 = pneg %p37
        $region22: #{tpu_custom_call.1} parent=19 // pred_check_branch
          %166 = sbr.rel (%p164) target = $region24
        $region23: #{tpu_custom_call.1} parent=19 // pred_region
          %s167 = smul.u32 32, %s17
          %p168 = scmp.lt.s32.totalorder %s167, 63
          %s169 = scalar_select %p168, %s167, 63
          %s170 = smul.addr %s169, 2
          %s171 = smul.addr %s170, 4
          %s172 = scalar_lea.vmem %s0, %s171
          %s173 = smul.u32 32, %s17
        $region24: #{tpu_custom_call.1} parent=19 // pred_fallthru
          _
      $region20: #{tpu_custom_call.1} parent=5 // pred_fallthru
        _
      %p174 = scmp.le.s32.totalorder 1, %s17
      %p175 = scmp.lt.s32.totalorder %s17, 3
      %p176 = pnand %p174, %p175
      %p177 = pneg %p176
      // Predicated region
      $region25: #{tpu_custom_call.1} parent=5 // pred_check
        _
      $region26: #{tpu_custom_call.1} parent=5 // pred_check_branch
        %179 = sbr.rel (%p176) target = $region28
      $region27: #{tpu_custom_call.1} parent=5 // pred_region
        %s180 = ssub.s32 %s17, 1
        %s181 = smul.u32 32, %s22
        %p182 = scmp.lt.s32.totalorder %s181, 63
        %s183 = scalar_select %p182, %s181, 63
        %s184 = smul.addr %s183, 2
        %s185 = smul.addr %s184, 4
        %s186 = scalar_lea.vmem %s0, %s185
        %p187 = pneg %p43
        %p188 = pneg %p40
        %p189 = pneg %p64
        %p190 = pneg %p61
        %p191 = pneg %p90
        %p192 = pneg %p87
        %s193 = smul.u32 32, %s22
        %p194 = scmp.lt.s32.totalorder %s193, 63
        %s195 = scalar_select %p194, %s193, 63
        %s196 = smul.addr %s195, 4
        %s197 = scalar_lea.vmem %s2, %s196
        %p198 = pneg %p116
        %p199 = pneg %p113
        %s200 = sand.u32 %s103, 1
        %s201 = scalar_lea.sflag [#allocation3], %s200
        %s202 = sand.u32 %s103, 1
        %s203 = scalar_lea.vmem [#allocation2], %s202
        %p204 = pneg %p142
        %p205 = pneg %p139
        %s206 = sand.u32 %s129, 1
        %s207 = scalar_lea.sflag [#allocation5], %s206
        %s208 = sand.u32 %s129, 1
        %s209 = scalar_lea.vmem [#allocation4], %s208
        %s210 = smul.u32 32, %s22
        %p211 = scmp.lt.s32.totalorder %s210, 63
        %s212 = scalar_select %p211, %s210, 63
        %s213 = smul.addr %s212, 2
        %s214 = smul.addr %s213, 4
        %s215 = scalar_lea.vmem %s0, %s214
        %s216 = smul.u32 32, %s22
        %s217 = smul.u32 32, %s22
        %p218 = scmp.lt.s32.totalorder %s217, 63
        %s219 = scalar_select %p218, %s217, 63
        %s220 = smul.addr %s219, 4
        %s221 = scalar_lea.vmem %s2, %s220
        %s222 = smul.u32 32, %s22
        %v224 = vld [vmem:[%s215] sm:$0xff]
        %v225 = vld [vmem:[%s215 + $0x8] sm:$0xff]
        %v226 = vld [vmem:[%s215 + $0x10] sm:$0xff]
        %v227 = vld [vmem:[%s215 + $0x18] sm:$0xff]
        %v228 = vld [vmem:[%s215 + $0x20] sm:$0xff]
        %v229 = vld [vmem:[%s215 + $0x28] sm:$0xff]
        %v230 = vld [vmem:[%s215 + $0x30] sm:$0xff]
        %v231 = vld [vmem:[%s215 + $0x38] sm:$0xff]
        %v232 = vld [vmem:[%s215 + $0x40] sm:$0xff]
        %v233 = vld [vmem:[%s215 + $0x48] sm:$0xff]
        %v234 = vld [vmem:[%s215 + $0x50] sm:$0xff]
        %v235 = vld [vmem:[%s215 + $0x58] sm:$0xff]
        %v236 = vld [vmem:[%s215 + $0x60] sm:$0xff]
        %v237 = vld [vmem:[%s215 + $0x68] sm:$0xff]
        %v238 = vld [vmem:[%s215 + $0x70] sm:$0xff]
        %v239 = vld [vmem:[%s215 + $0x78] sm:$0xff]
        %v240 = vld [vmem:[%s215 + $0x80] sm:$0xff]
        %v241 = vld [vmem:[%s215 + $0x88] sm:$0xff]
        %v242 = vld [vmem:[%s215 + $0x90] sm:$0xff]
        %v243 = vld [vmem:[%s215 + $0x98] sm:$0xff]
        %v244 = vld [vmem:[%s215 + $0xa0] sm:$0xff]
        %v245 = vld [vmem:[%s215 + $0xa8] sm:$0xff]
        %v246 = vld [vmem:[%s215 + $0xb0] sm:$0xff]
        %v247 = vld [vmem:[%s215 + $0xb8] sm:$0xff]
        %v248 = vld [vmem:[%s215 + $0xc0] sm:$0xff]
        %v249 = vld [vmem:[%s215 + $0xc8] sm:$0xff]
        %v250 = vld [vmem:[%s215 + $0xd0] sm:$0xff]
        %v251 = vld [vmem:[%s215 + $0xd8] sm:$0xff]
        %v252 = vld [vmem:[%s215 + $0xe0] sm:$0xff]
        %v253 = vld [vmem:[%s215 + $0xe8] sm:$0xff]
        %v254 = vld [vmem:[%s215 + $0xf0] sm:$0xff]
        %v255 = vld [vmem:[%s215 + $0xf8] sm:$0xff]
        %v256 = vld [vmem:[%s1] sm:$0xf]
        %v257 = vld [vmem:[%s1 + $0x4] sm:$0xf]
        %v258 = vld [vmem:[%s1 + $0x8] sm:$0xf]
        %v259 = vld [vmem:[%s1 + $0xc] sm:$0xf]
        %v260 = vld [vmem:[%s1 + $0x10] sm:$0xf]
        %v261 = vld [vmem:[%s1 + $0x14] sm:$0xf]
        %v262 = vld [vmem:[%s1 + $0x18] sm:$0xf]
        %v263 = vld [vmem:[%s1 + $0x1c] sm:$0xf]
        %v264 = vld [vmem:[%s1 + $0x20] sm:$0xf]
        %v265 = vld [vmem:[%s1 + $0x24] sm:$0xf]
        %v266 = vld [vmem:[%s1 + $0x28] sm:$0xf]
        %v267 = vld [vmem:[%s1 + $0x2c] sm:$0xf]
        %v268 = vld [vmem:[%s1 + $0x30] sm:$0xf]
        %v269 = vld [vmem:[%s1 + $0x34] sm:$0xf]
        %v270 = vld [vmem:[%s1 + $0x38] sm:$0xf]
        %v271 = vld [vmem:[%s1 + $0x3c] sm:$0xf]
        %v272 = vld [vmem:[%s1 + $0x40] sm:$0xf]
        %v273 = vld [vmem:[%s1 + $0x44] sm:$0xf]
        %v274 = vld [vmem:[%s1 + $0x48] sm:$0x3]
        %v307 = vunpack.c.l.b16 %v224
        %v308 = vunpack.c.h.b16 %v224
        %v309 = vunpack.c.l.b16 %v225
        %v310 = vunpack.c.h.b16 %v225
        %v311 = vunpack.c.l.b16 %v226
        %v312 = vunpack.c.h.b16 %v226
        %v313 = vunpack.c.l.b16 %v227
        %v314 = vunpack.c.h.b16 %v227
        %v315 = vunpack.c.l.b16 %v228
        %v316 = vunpack.c.h.b16 %v228
        %v317 = vunpack.c.l.b16 %v229
        %v318 = vunpack.c.h.b16 %v229
        %v319 = vunpack.c.l.b16 %v230
        %v320 = vunpack.c.h.b16 %v230
        %v321 = vunpack.c.l.b16 %v231
        %v322 = vunpack.c.h.b16 %v231
        %v323 = vunpack.c.l.b16 %v232
        %v324 = vunpack.c.h.b16 %v232
        %v325 = vunpack.c.l.b16 %v233
        %v326 = vunpack.c.h.b16 %v233
        %v327 = vunpack.c.l.b16 %v234
        %v328 = vunpack.c.h.b16 %v234
        %v329 = vunpack.c.l.b16 %v235
        %v330 = vunpack.c.h.b16 %v235
        %v331 = vunpack.c.l.b16 %v236
        %v332 = vunpack.c.h.b16 %v236
        %v333 = vunpack.c.l.b16 %v237
        %v334 = vunpack.c.h.b16 %v237
        %v335 = vunpack.c.l.b16 %v238
        %v336 = vunpack.c.h.b16 %v238
        %v337 = vunpack.c.l.b16 %v239
        %v338 = vunpack.c.h.b16 %v239
        %v339 = vunpack.c.l.b16 %v240
        %v340 = vunpack.c.h.b16 %v240
        %v341 = vunpack.c.l.b16 %v241
        %v342 = vunpack.c.h.b16 %v241
        %v343 = vunpack.c.l.b16 %v242
        %v344 = vunpack.c.h.b16 %v242
        %v345 = vunpack.c.l.b16 %v243
        %v346 = vunpack.c.h.b16 %v243
        %v347 = vunpack.c.l.b16 %v244
        %v348 = vunpack.c.h.b16 %v244
        %v349 = vunpack.c.l.b16 %v245
        %v350 = vunpack.c.h.b16 %v245
        %v351 = vunpack.c.l.b16 %v246
        %v352 = vunpack.c.h.b16 %v246
        %v353 = vunpack.c.l.b16 %v247
        %v354 = vunpack.c.h.b16 %v247
        %v355 = vunpack.c.l.b16 %v248
        %v356 = vunpack.c.h.b16 %v248
        %v357 = vunpack.c.l.b16 %v249
        %v358 = vunpack.c.h.b16 %v249
        %v359 = vunpack.c.l.b16 %v250
        %v360 = vunpack.c.h.b16 %v250
        %v361 = vunpack.c.l.b16 %v251
        %v362 = vunpack.c.h.b16 %v251
        %v363 = vunpack.c.l.b16 %v252
        %v364 = vunpack.c.h.b16 %v252
        %v365 = vunpack.c.l.b16 %v253
        %v366 = vunpack.c.h.b16 %v253
        %v367 = vunpack.c.l.b16 %v254
        %v368 = vunpack.c.h.b16 %v254
        %v369 = vunpack.c.l.b16 %v255
        %v370 = vunpack.c.h.b16 %v255
        %v371 = vpack.c.b16 %v309, %v307
        %v372 = vpack.c.b16 %v310, %v308
        %v373 = vpack.c.b16 %v313, %v311
        %v374 = vpack.c.b16 %v314, %v312
        %v375 = vpack.c.b16 %v317, %v315
        %v376 = vpack.c.b16 %v318, %v316
        %v377 = vpack.c.b16 %v321, %v319
        %v378 = vpack.c.b16 %v322, %v320
        %v379 = vpack.c.b16 %v325, %v323
        %v380 = vpack.c.b16 %v326, %v324
        %v381 = vpack.c.b16 %v329, %v327
        %v382 = vpack.c.b16 %v330, %v328
        %v383 = vpack.c.b16 %v333, %v331
        %v384 = vpack.c.b16 %v334, %v332
        %v385 = vpack.c.b16 %v337, %v335
        %v386 = vpack.c.b16 %v338, %v336
        %v387 = vpack.c.b16 %v341, %v339
        %v388 = vpack.c.b16 %v342, %v340
        %v389 = vpack.c.b16 %v345, %v343
        %v390 = vpack.c.b16 %v346, %v344
        %v391 = vpack.c.b16 %v349, %v347
        %v392 = vpack.c.b16 %v350, %v348
        %v393 = vpack.c.b16 %v353, %v351
        %v394 = vpack.c.b16 %v354, %v352
        %v395 = vpack.c.b16 %v357, %v355
        %v396 = vpack.c.b16 %v358, %v356
        %v397 = vpack.c.b16 %v361, %v359
        %v398 = vpack.c.b16 %v362, %v360
        %v399 = vpack.c.b16 %v365, %v363
        %v400 = vpack.c.b16 %v366, %v364
        %v401 = vpack.c.b16 %v369, %v367
        %v402 = vpack.c.b16 %v370, %v368
        %v438 = vunpack.c.l.b16 %v256
        %v439 = vunpack.c.l.b16 %v257
        %v440 = vunpack.c.l.b16 %v258
        %v441 = vunpack.c.l.b16 %v259
        %v442 = vunpack.c.l.b16 %v260
        %v443 = vunpack.c.l.b16 %v261
        %v444 = vunpack.c.l.b16 %v262
        %v445 = vunpack.c.l.b16 %v263
        %v446 = vunpack.c.l.b16 %v264
        %v447 = vunpack.c.l.b16 %v265
        %v448 = vunpack.c.l.b16 %v266
        %v449 = vunpack.c.l.b16 %v267
        %v450 = vunpack.c.l.b16 %v268
        %v451 = vunpack.c.l.b16 %v269
        %v452 = vunpack.c.l.b16 %v270
        %v453 = vunpack.c.l.b16 %v271
        %v454 = vunpack.c.l.b16 %v272
        %v455 = vunpack.c.l.b16 %v273
        %v456 = vunpack.c.l.b16 %v274
        %v457 = vpack.c.b16 %v439, %v438
        %v458 = vpack.c.b16 %v441, %v440
        %v459 = vpack.c.b16 %v443, %v442
        %v460 = vpack.c.b16 %v445, %v444
        %v461 = vpack.c.b16 %v447, %v446
        %v462 = vpack.c.b16 %v449, %v448
        %v463 = vpack.c.b16 %v451, %v450
        %v464 = vpack.c.b16 %v453, %v452
        %v465 = vpack.c.b16 %v455, %v454
        %v466 = vpack.c.b16 %v456, %v456
        %vm476 = vcmask 154624
        %v478 = vsel %vm476, %v372, 0
        %v481 = vsel %vm476, %v374, 0
        %v484 = vsel %vm476, %v376, 0
        %v487 = vsel %vm476, %v378, 0
        %v490 = vsel %vm476, %v380, 0
        %v493 = vsel %vm476, %v382, 0
        %v496 = vsel %vm476, %v384, 0
        %v499 = vsel %vm476, %v386, 0
        %v502 = vsel %vm476, %v388, 0
        %v505 = vsel %vm476, %v390, 0
        %v508 = vsel %vm476, %v392, 0
        %v511 = vsel %vm476, %v394, 0
        %v514 = vsel %vm476, %v396, 0
        %v517 = vsel %vm476, %v398, 0
        %v520 = vsel %vm476, %v400, 0
        %v523 = vsel %vm476, %v402, 0
        %vm525 = vcmask 1040384
        %vm526 = vcmask 1041408
        %v527 = vsel %vm525, 4294967295, 65535
        %v528 = vsel %vm526, %v527, 0
        %v530 = vand.u32 %v466, %v528
        %532 = vmatprep.subr.bf16.mxu0 0
        %533 = vmatpush1.bf16.msra.mxu0 %v457
        %534 = vmatprep.subr.bf16.mxu0 0
        %535 = vmatpush1.bf16.msra.mxu0 %v458
        %536 = vmatprep.subr.bf16.mxu0 0
        %537 = vmatpush1.bf16.msra.mxu0 %v459
        %538 = vmatprep.subr.bf16.mxu0 0
        %539 = vmatpush1.bf16.msra.mxu0 %v460
        %540 = vmatprep.subr.bf16.mxu0 0
        %541 = vmatpush1.bf16.msra.mxu0 %v461
        %542 = vmatprep.subr.bf16.mxu0 0
        %543 = vmatpush1.bf16.msra.mxu0 %v462
        %544 = vmatprep.subr.bf16.mxu0 0
        %545 = vmatpush1.bf16.msra.mxu0 %v463
        %546 = vmatprep.subr.bf16.mxu0 0
        %547 = vmatpush1.bf16.msra.mxu0 %v464
        %548 = vmatprep.subr.bf16.mxu0 0
        %549 = vmatpush1.bf16.msra.mxu0 %v465
        %550 = vmatprep.subr.bf16.mxu0 0
        %551 = vmatpush1.bf16.msra.mxu0 %v530
        %552 = vmatprep.subr.bf16.mxu0 0
        %553 = vmatpush1.bf16.msra.mxu0 0
        %554 = vmatprep.subr.bf16.mxu0 0
        %555 = vmatpush1.bf16.msra.mxu0 0
        %556 = vmatprep.subr.bf16.mxu0 0
        %557 = vmatpush1.bf16.msra.mxu0 0
        %558 = vmatprep.subr.bf16.mxu0 0
        %559 = vmatpush1.bf16.msra.mxu0 0
        %560 = vmatprep.subr.bf16.mxu0 0
        %561 = vmatpush1.bf16.msra.mxu0 0
        %562 = vmatprep.subr.bf16.mxu0 0
        %563 = vmatpush1.bf16.msra.mxu0 0
        %564 = vmatprep.mubr.bf16.mxu0 %v478
        %565 = vmatmul.mubr.bf16.gmra.mrb[0].mxu0 %v371
        %v566 = vpop.f32.mrb[0].mxu0
        %v567 = vadd.f32 0.0, %v566
        %v568 = vpop.f32.mrb[0].mxu0
        %v569 = vpop.f32.mrb[0].mxu0
        %v570 = vadd.f32 0.0, %v569
        %v571 = vpop.f32.mrb[0].mxu0
        %572 = vmatprep.mubr.bf16.mxu0 %v481
        %573 = vmatmul.mubr.bf16.gmra.mrb[0].mxu0 %v373
        %v574 = vpop.f32.mrb[0].mxu0
        %v575 = vadd.f32 0.0, %v574
        %v576 = vpop.f32.mrb[0].mxu0
        %v577 = vpop.f32.mrb[0].mxu0
        %v578 = vadd.f32 0.0, %v577
        %v579 = vpop.f32.mrb[0].mxu0
        %580 = vmatprep.mubr.bf16.mxu0 %v484
        %581 = vmatmul.mubr.bf16.gmra.mrb[0].mxu0 %v375
        %v582 = vpop.f32.mrb[0].mxu0
        %v583 = vadd.f32 0.0, %v582
        %v584 = vpop.f32.mrb[0].mxu0
        %v585 = vpop.f32.mrb[0].mxu0
        %v586 = vadd.f32 0.0, %v585
        %v587 = vpop.f32.mrb[0].mxu0
        %588 = vmatprep.mubr.bf16.mxu0 %v487
        %589 = vmatmul.mubr.bf16.gmra.mrb[0].mxu0 %v377
        %v590 = vpop.f32.mrb[0].mxu0
        %v591 = vadd.f32 0.0, %v590
        %v592 = vpop.f32.mrb[0].mxu0
        %v593 = vpop.f32.mrb[0].mxu0
        %v594 = vadd.f32 0.0, %v593
        %v595 = vpop.f32.mrb[0].mxu0
        %596 = vmatprep.mubr.bf16.mxu0 %v490
        %597 = vmatmul.mubr.bf16.gmra.mrb[0].mxu0 %v379
        %v598 = vpop.f32.mrb[0].mxu0
        %v599 = vadd.f32 0.0, %v598
        %v600 = vpop.f32.mrb[0].mxu0
        %v601 = vpop.f32.mrb[0].mxu0
        %v602 = vadd.f32 0.0, %v601
        %v603 = vpop.f32.mrb[0].mxu0
        %604 = vmatprep.mubr.bf16.mxu0 %v493
        %605 = vmatmul.mubr.bf16.gmra.mrb[0].mxu0 %v381
        %v606 = vpop.f32.mrb[0].mxu0
        %v607 = vadd.f32 0.0, %v606
        %v608 = vpop.f32.mrb[0].mxu0
        %v609 = vpop.f32.mrb[0].mxu0
        %v610 = vadd.f32 0.0, %v609
        %v611 = vpop.f32.mrb[0].mxu0
        %612 = vmatprep.mubr.bf16.mxu0 %v496
        %613 = vmatmul.mubr.bf16.gmra.mrb[0].mxu0 %v383
        %v614 = vpop.f32.mrb[0].mxu0
        %v615 = vadd.f32 0.0, %v614
        %v616 = vpop.f32.mrb[0].mxu0
        %v617 = vpop.f32.mrb[0].mxu0
        %v618 = vadd.f32 0.0, %v617
        %v619 = vpop.f32.mrb[0].mxu0
        %620 = vmatprep.mubr.bf16.mxu0 %v499
        %621 = vmatmul.mubr.bf16.gmra.mrb[0].mxu0 %v385
        %v622 = vpop.f32.mrb[0].mxu0
        %v623 = vadd.f32 0.0, %v622
        %v624 = vpop.f32.mrb[0].mxu0
        %v625 = vpop.f32.mrb[0].mxu0
        %v626 = vadd.f32 0.0, %v625
        %v627 = vpop.f32.mrb[0].mxu0
        %628 = vmatprep.mubr.bf16.mxu0 %v502
        %629 = vmatmul.mubr.bf16.gmra.mrb[0].mxu0 %v387
        %v630 = vpop.f32.mrb[0].mxu0
        %v631 = vadd.f32 0.0, %v630
        %v632 = vpop.f32.mrb[0].mxu0
        %v633 = vpop.f32.mrb[0].mxu0
        %v634 = vadd.f32 0.0, %v633
        %v635 = vpop.f32.mrb[0].mxu0
        %636 = vmatprep.mubr.bf16.mxu0 %v505
        %637 = vmatmul.mubr.bf16.gmra.mrb[0].mxu0 %v389
        %v638 = vpop.f32.mrb[0].mxu0
        %v639 = vadd.f32 0.0, %v638
        %v640 = vpop.f32.mrb[0].mxu0
        %v641 = vpop.f32.mrb[0].mxu0
        %v642 = vadd.f32 0.0, %v641
        %v643 = vpop.f32.mrb[0].mxu0
        %644 = vmatprep.mubr.bf16.mxu0 %v508
        %645 = vmatmul.mubr.bf16.gmra.mrb[0].mxu0 %v391
        %v646 = vpop.f32.mrb[0].mxu0
        %v647 = vadd.f32 0.0, %v646
        %v648 = vpop.f32.mrb[0].mxu0
        %v649 = vpop.f32.mrb[0].mxu0
        %v650 = vadd.f32 0.0, %v649
        %v651 = vpop.f32.mrb[0].mxu0
        %652 = vmatprep.mubr.bf16.mxu0 %v511
        %653 = vmatmul.mubr.bf16.gmra.mrb[0].mxu0 %v393
        %v654 = vpop.f32.mrb[0].mxu0
        %v655 = vadd.f32 0.0, %v654
        %v656 = vpop.f32.mrb[0].mxu0
        %v657 = vpop.f32.mrb[0].mxu0
        %v658 = vadd.f32 0.0, %v657
        %v659 = vpop.f32.mrb[0].mxu0
        %660 = vmatprep.mubr.bf16.mxu0 %v514
        %661 = vmatmul.mubr.bf16.gmra.mrb[0].mxu0 %v395
        %v662 = vpop.f32.mrb[0].mxu0
        %v663 = vadd.f32 0.0, %v662
        %v664 = vpop.f32.mrb[0].mxu0
        %v665 = vpop.f32.mrb[0].mxu0
        %v666 = vadd.f32 0.0, %v665
        %v667 = vpop.f32.mrb[0].mxu0
        %668 = vmatprep.mubr.bf16.mxu0 %v517
        %669 = vmatmul.mubr.bf16.gmra.mrb[0].mxu0 %v397
        %v670 = vpop.f32.mrb[0].mxu0
        %v671 = vadd.f32 0.0, %v670
        %v672 = vpop.f32.mrb[0].mxu0
        %v673 = vpop.f32.mrb[0].mxu0
        %v674 = vadd.f32 0.0, %v673
        %v675 = vpop.f32.mrb[0].mxu0
        %676 = vmatprep.mubr.bf16.mxu0 %v520
        %677 = vmatmul.mubr.bf16.gmra.mrb[0].mxu0 %v399
        %v678 = vpop.f32.mrb[0].mxu0
        %v679 = vadd.f32 0.0, %v678
        %v680 = vpop.f32.mrb[0].mxu0
        %v681 = vpop.f32.mrb[0].mxu0
        %v682 = vadd.f32 0.0, %v681
        %v683 = vpop.f32.mrb[0].mxu0
        %684 = vmatprep.mubr.bf16.mxu0 %v523
        %685 = vmatmul.mubr.bf16.gmra.mrb[0].mxu0 %v401
        %v686 = vpop.f32.mrb[0].mxu0
        %v687 = vadd.f32 0.0, %v686
        %v688 = vpop.f32.mrb[0].mxu0
        %v689 = vpop.f32.mrb[0].mxu0
        %v690 = vadd.f32 0.0, %v689
        %v691 = vpop.f32.mrb[0].mxu0
        %692 = vdwg.mxu0
        %v693 = vpack.c.bf16 %v570, %v567
        %v694 = vpack.c.bf16 %v578, %v575
        %v695 = vpack.c.bf16 %v586, %v583
        %v696 = vpack.c.bf16 %v594, %v591
        %v697 = vpack.c.bf16 %v602, %v599
        %v698 = vpack.c.bf16 %v610, %v607
        %v699 = vpack.c.bf16 %v618, %v615
        %v700 = vpack.c.bf16 %v626, %v623
        %v701 = vpack.c.bf16 %v634, %v631
        %v702 = vpack.c.bf16 %v642, %v639
        %v703 = vpack.c.bf16 %v650, %v647
        %v704 = vpack.c.bf16 %v658, %v655
        %v705 = vpack.c.bf16 %v666, %v663
        %v706 = vpack.c.bf16 %v674, %v671
        %v707 = vpack.c.bf16 %v682, %v679
        %v708 = vpack.c.bf16 %v690, %v687
        %v725 = vunpack.c.l.b16 %v693
        %v726 = vunpack.c.h.b16 %v693
        %v727 = vunpack.c.l.b16 %v694
        %v728 = vunpack.c.h.b16 %v694
        %v729 = vunpack.c.l.b16 %v695
        %v730 = vunpack.c.h.b16 %v695
        %v731 = vunpack.c.l.b16 %v696
        %v732 = vunpack.c.h.b16 %v696
        %v733 = vunpack.c.l.b16 %v697
        %v734 = vunpack.c.h.b16 %v697
        %v735 = vunpack.c.l.b16 %v698
        %v736 = vunpack.c.h.b16 %v698
        %v737 = vunpack.c.l.b16 %v699
        %v738 = vunpack.c.h.b16 %v699
        %v739 = vunpack.c.l.b16 %v700
        %v740 = vunpack.c.h.b16 %v700
        %v741 = vunpack.c.l.b16 %v701
        %v742 = vunpack.c.h.b16 %v701
        %v743 = vunpack.c.l.b16 %v702
        %v744 = vunpack.c.h.b16 %v702
        %v745 = vunpack.c.l.b16 %v703
        %v746 = vunpack.c.h.b16 %v703
        %v747 = vunpack.c.l.b16 %v704
        %v748 = vunpack.c.h.b16 %v704
        %v749 = vunpack.c.l.b16 %v705
        %v750 = vunpack.c.h.b16 %v705
        %v751 = vunpack.c.l.b16 %v706
        %v752 = vunpack.c.h.b16 %v706
        %v753 = vunpack.c.l.b16 %v707
        %v754 = vunpack.c.h.b16 %v707
        %v755 = vunpack.c.l.b16 %v708
        %v756 = vunpack.c.h.b16 %v708
        %v757 = vpack.c.b16 %v725, %v725
        %v758 = vpack.c.b16 %v726, %v726
        %v759 = vpack.c.b16 %v727, %v727
        %v760 = vpack.c.b16 %v728, %v728
        %v761 = vpack.c.b16 %v729, %v729
        %v762 = vpack.c.b16 %v730, %v730
        %v763 = vpack.c.b16 %v731, %v731
        %v764 = vpack.c.b16 %v732, %v732
        %v765 = vpack.c.b16 %v733, %v733
        %v766 = vpack.c.b16 %v734, %v734
        %v767 = vpack.c.b16 %v735, %v735
        %v768 = vpack.c.b16 %v736, %v736
        %v769 = vpack.c.b16 %v737, %v737
        %v770 = vpack.c.b16 %v738, %v738
        %v771 = vpack.c.b16 %v739, %v739
        %v772 = vpack.c.b16 %v740, %v740
        %v773 = vpack.c.b16 %v741, %v741
        %v774 = vpack.c.b16 %v742, %v742
        %v775 = vpack.c.b16 %v743, %v743
        %v776 = vpack.c.b16 %v744, %v744
        %v777 = vpack.c.b16 %v745, %v745
        %v778 = vpack.c.b16 %v746, %v746
        %v779 = vpack.c.b16 %v747, %v747
        %v780 = vpack.c.b16 %v748, %v748
        %v781 = vpack.c.b16 %v749, %v749
        %v782 = vpack.c.b16 %v750, %v750
        %v783 = vpack.c.b16 %v751, %v751
        %v784 = vpack.c.b16 %v752, %v752
        %v785 = vpack.c.b16 %v753, %v753
        %v786 = vpack.c.b16 %v754, %v754
        %v787 = vpack.c.b16 %v755, %v755
        %v788 = vpack.c.b16 %v756, %v756
        %vm821 = vcmask 519168
        %822 = vst.msk [vmem:[%s221] sm:$0xf] %vm821, %v757
        %823 = vst.msk [vmem:[%s221 + $0x4] sm:$0xf] %vm821, %v758
        %824 = vst.msk [vmem:[%s221 + $0x8] sm:$0xf] %vm821, %v759
        %825 = vst.msk [vmem:[%s221 + $0xc] sm:$0xf] %vm821, %v760
        %826 = vst.msk [vmem:[%s221 + $0x10] sm:$0xf] %vm821, %v761
        %827 = vst.msk [vmem:[%s221 + $0x14] sm:$0xf] %vm821, %v762
        %828 = vst.msk [vmem:[%s221 + $0x18] sm:$0xf] %vm821, %v763
        %829 = vst.msk [vmem:[%s221 + $0x1c] sm:$0xf] %vm821, %v764
        %830 = vst.msk [vmem:[%s221 + $0x20] sm:$0xf] %vm821, %v765
        %831 = vst.msk [vmem:[%s221 + $0x24] sm:$0xf] %vm821, %v766
        %832 = vst.msk [vmem:[%s221 + $0x28] sm:$0xf] %vm821, %v767
        %833 = vst.msk [vmem:[%s221 + $0x2c] sm:$0xf] %vm821, %v768
        %834 = vst.msk [vmem:[%s221 + $0x30] sm:$0xf] %vm821, %v769
        %835 = vst.msk [vmem:[%s221 + $0x34] sm:$0xf] %vm821, %v770
        %836 = vst.msk [vmem:[%s221 + $0x38] sm:$0xf] %vm821, %v771
        %837 = vst.msk [vmem:[%s221 + $0x3c] sm:$0xf] %vm821, %v772
        %838 = vst.msk [vmem:[%s221 + $0x40] sm:$0xf] %vm821, %v773
        %839 = vst.msk [vmem:[%s221 + $0x44] sm:$0xf] %vm821, %v774
        %840 = vst.msk [vmem:[%s221 + $0x48] sm:$0xf] %vm821, %v775
        %841 = vst.msk [vmem:[%s221 + $0x4c] sm:$0xf] %vm821, %v776
        %842 = vst.msk [vmem:[%s221 + $0x50] sm:$0xf] %vm821, %v777
        %843 = vst.msk [vmem:[%s221 + $0x54] sm:$0xf] %vm821, %v778
        %844 = vst.msk [vmem:[%s221 + $0x58] sm:$0xf] %vm821, %v779
        %845 = vst.msk [vmem:[%s221 + $0x5c] sm:$0xf] %vm821, %v780
        %846 = vst.msk [vmem:[%s221 + $0x60] sm:$0xf] %vm821, %v781
        %847 = vst.msk [vmem:[%s221 + $0x64] sm:$0xf] %vm821, %v782
        %848 = vst.msk [vmem:[%s221 + $0x68] sm:$0xf] %vm821, %v783
        %849 = vst.msk [vmem:[%s221 + $0x6c] sm:$0xf] %vm821, %v784
        %850 = vst.msk [vmem:[%s221 + $0x70] sm:$0xf] %vm821, %v785
        %851 = vst.msk [vmem:[%s221 + $0x74] sm:$0xf] %vm821, %v786
        %852 = vst.msk [vmem:[%s221 + $0x78] sm:$0xf] %vm821, %v787
        %853 = vst.msk [vmem:[%s221 + $0x7c] sm:$0xf] %vm821, %v788
        %vm854 = vcmask 523264
        %v855 = vsel %vm854, %v567, 0.0
        %v856 = vsel %vm854, %v570, 0.0
        %v857 = vadd.f32 %v855, %v856
        %v858 = vsel %vm854, %v575, 0.0
        %v859 = vadd.f32 %v857, %v858
        %v860 = vsel %vm854, %v578, 0.0
        %v861 = vadd.f32 %v859, %v860
        %v862 = vsel %vm854, %v583, 0.0
        %v863 = vadd.f32 %v861, %v862
        %v864 = vsel %vm854, %v586, 0.0
        %v865 = vadd.f32 %v863, %v864
        %v866 = vsel %vm854, %v591, 0.0
        %v867 = vadd.f32 %v865, %v866
        %v868 = vsel %vm854, %v594, 0.0
        %v869 = vadd.f32 %v867, %v868
        %v870 = vsel %vm854, %v599, 0.0
        %v871 = vadd.f32 %v869, %v870
        %v872 = vsel %vm854, %v602, 0.0
        %v873 = vadd.f32 %v871, %v872
        %v874 = vsel %vm854, %v607, 0.0
        %v875 = vadd.f32 %v873, %v874
        %v876 = vsel %vm854, %v610, 0.0
        %v877 = vadd.f32 %v875, %v876
        %v878 = vsel %vm854, %v615, 0.0
        %v879 = vadd.f32 %v877, %v878
        %v880 = vsel %vm854, %v618, 0.0
        %v881 = vadd.f32 %v879, %v880
        %v882 = vsel %vm854, %v623, 0.0
        %v883 = vadd.f32 %v881, %v882
        %v884 = vsel %vm854, %v626, 0.0
        %v885 = vadd.f32 %v883, %v884
        %v886 = vsel %vm854, %v631, 0.0
        %v887 = vadd.f32 %v885, %v886
        %v888 = vsel %vm854, %v634, 0.0
        %v889 = vadd.f32 %v887, %v888
        %v890 = vsel %vm854, %v639, 0.0
        %v891 = vadd.f32 %v889, %v890
        %v892 = vsel %vm854, %v642, 0.0
        %v893 = vadd.f32 %v891, %v892
        %v894 = vsel %vm854, %v647, 0.0
        %v895 = vadd.f32 %v893, %v894
        %v896 = vsel %vm854, %v650, 0.0
        %v897 = vadd.f32 %v895, %v896
        %v898 = vsel %vm854, %v655, 0.0
        %v899 = vadd.f32 %v897, %v898
        %v900 = vsel %vm854, %v658, 0.0
        %v901 = vadd.f32 %v899, %v900
        %v902 = vsel %vm854, %v663, 0.0
        %v903 = vadd.f32 %v901, %v902
        %v904 = vsel %vm854, %v666, 0.0
        %v905 = vadd.f32 %v903, %v904
        %v906 = vsel %vm854, %v671, 0.0
        %v907 = vadd.f32 %v905, %v906
        %v908 = vsel %vm854, %v674, 0.0
        %v909 = vadd.f32 %v907, %v908
        %v910 = vsel %vm854, %v679, 0.0
        %v911 = vadd.f32 %v909, %v910
        %v912 = vsel %vm854, %v682, 0.0
        %v913 = vadd.f32 %v911, %v912
        %v914 = vsel %vm854, %v687, 0.0
        %v915 = vadd.f32 %v913, %v914
        %v916 = vsel %vm854, %v690, 0.0
        %v917 = vadd.f32 %v915, %v916
        %v918 = vrot.slane %v917, 4
        %v919 = vadd.f32 %v917, %v918
        %v920 = vrot.slane %v919, 2
        %v921 = vadd.f32 %v919, %v920
        %v922 = vrot.slane %v921, 1
        %v923 = vadd.f32 %v921, %v922
        %vm924 = vcmask 516096
        %925 = vst.msk [vmem:[%s203] sm:$0x1] %vm924, %v923
        %v926 = vmul.f32 %v567, %v567
        %v927 = vmul.f32 %v570, %v570
        %v928 = vmul.f32 %v575, %v575
        %v929 = vmul.f32 %v578, %v578
        %v930 = vmul.f32 %v583, %v583
        %v931 = vmul.f32 %v586, %v586
        %v932 = vmul.f32 %v591, %v591
        %v933 = vmul.f32 %v594, %v594
        %v934 = vmul.f32 %v599, %v599
        %v935 = vmul.f32 %v602, %v602
        %v936 = vmul.f32 %v607, %v607
        %v937 = vmul.f32 %v610, %v610
        %v938 = vmul.f32 %v615, %v615
        %v939 = vmul.f32 %v618, %v618
        %v940 = vmul.f32 %v623, %v623
        %v941 = vmul.f32 %v626, %v626
        %v942 = vmul.f32 %v631, %v631
        %v943 = vmul.f32 %v634, %v634
        %v944 = vmul.f32 %v639, %v639
        %v945 = vmul.f32 %v642, %v642
        %v946 = vmul.f32 %v647, %v647
        %v947 = vmul.f32 %v650, %v650
        %v948 = vmul.f32 %v655, %v655
        %v949 = vmul.f32 %v658, %v658
        %v950 = vmul.f32 %v663, %v663
        %v951 = vmul.f32 %v666, %v666
        %v952 = vmul.f32 %v671, %v671
        %v953 = vmul.f32 %v674, %v674
        %v954 = vmul.f32 %v679, %v679
        %v955 = vmul.f32 %v682, %v682
        %v956 = vmul.f32 %v687, %v687
        %v957 = vmul.f32 %v690, %v690
        %v958 = vsel %vm854, %v926, 0.0
        %v959 = vsel %vm854, %v927, 0.0
        %v960 = vadd.f32 %v958, %v959
        %v961 = vsel %vm854, %v928, 0.0
        %v962 = vadd.f32 %v960, %v961
        %v963 = vsel %vm854, %v929, 0.0
        %v964 = vadd.f32 %v962, %v963
        %v965 = vsel %vm854, %v930, 0.0
        %v966 = vadd.f32 %v964, %v965
        %v967 = vsel %vm854, %v931, 0.0
        %v968 = vadd.f32 %v966, %v967
        %v969 = vsel %vm854, %v932, 0.0
        %v970 = vadd.f32 %v968, %v969
        %v971 = vsel %vm854, %v933, 0.0
        %v972 = vadd.f32 %v970, %v971
        %v973 = vsel %vm854, %v934, 0.0
        %v974 = vadd.f32 %v972, %v973
        %v975 = vsel %vm854, %v935, 0.0
        %v976 = vadd.f32 %v974, %v975
        %v977 = vsel %vm854, %v936, 0.0
        %v978 = vadd.f32 %v976, %v977
        %v979 = vsel %vm854, %v937, 0.0
        %v980 = vadd.f32 %v978, %v979
        %v981 = vsel %vm854, %v938, 0.0
        %v982 = vadd.f32 %v980, %v981
        %v983 = vsel %vm854, %v939, 0.0
        %v984 = vadd.f32 %v982, %v983
        %v985 = vsel %vm854, %v940, 0.0
        %v986 = vadd.f32 %v984, %v985
        %v987 = vsel %vm854, %v941, 0.0
        %v988 = vadd.f32 %v986, %v987
        %v989 = vsel %vm854, %v942, 0.0
        %v990 = vadd.f32 %v988, %v989
        %v991 = vsel %vm854, %v943, 0.0
        %v992 = vadd.f32 %v990, %v991
        %v993 = vsel %vm854, %v944, 0.0
        %v994 = vadd.f32 %v992, %v993
        %v995 = vsel %vm854, %v945, 0.0
        %v996 = vadd.f32 %v994, %v995
        %v997 = vsel %vm854, %v946, 0.0
        %v998 = vadd.f32 %v996, %v997
        %v999 = vsel %vm854, %v947, 0.0
        %v1000 = vadd.f32 %v998, %v999
        %v1001 = vsel %vm854, %v948, 0.0
        %v1002 = vadd.f32 %v1000, %v1001
        %v1003 = vsel %vm854, %v949, 0.0
        %v1004 = vadd.f32 %v1002, %v1003
        %v1005 = vsel %vm854, %v950, 0.0
        %v1006 = vadd.f32 %v1004, %v1005
        %v1007 = vsel %vm854, %v951, 0.0
        %v1008 = vadd.f32 %v1006, %v1007
        %v1009 = vsel %vm854, %v952, 0.0
        %v1010 = vadd.f32 %v1008, %v1009
        %v1011 = vsel %vm854, %v953, 0.0
        %v1012 = vadd.f32 %v1010, %v1011
        %v1013 = vsel %vm854, %v954, 0.0
        %v1014 = vadd.f32 %v1012, %v1013
        %v1015 = vsel %vm854, %v955, 0.0
        %v1016 = vadd.f32 %v1014, %v1015
        %v1017 = vsel %vm854, %v956, 0.0
        %v1018 = vadd.f32 %v1016, %v1017
        %v1019 = vsel %vm854, %v957, 0.0
        %v1020 = vadd.f32 %v1018, %v1019
        %v1021 = vrot.slane %v1020, 4
        %v1022 = vadd.f32 %v1020, %v1021
        %v1023 = vrot.slane %v1022, 2
        %v1024 = vadd.f32 %v1022, %v1023
        %v1025 = vrot.slane %v1024, 1
        %v1026 = vadd.f32 %v1024, %v1025
        %1027 = vst.msk [vmem:[%s209] sm:$0x1] %vm924, %v1026
        %s1028 = smul.u32 32, %s22
        %p1029 = scmp.lt.s32.totalorder %s1028, 63
        %s1030 = scalar_select %p1029, %s1028, 63
        %s1031 = smul.addr %s1030, 4
        %s1032 = scalar_lea.vmem %s2, %s1031
        %s1033 = sand.u32 %s103, 1
        %s1034 = scalar_lea.sflag [#allocation3], %s1033
        %s1035 = sand.u32 %s103, 1
        %s1036 = scalar_lea.vmem [#allocation2], %s1035
        %s1037 = sand.u32 %s129, 1
        %s1038 = scalar_lea.sflag [#allocation5], %s1037
        %s1039 = sand.u32 %s129, 1
        %s1040 = scalar_lea.vmem [#allocation4], %s1039
        // Predicated region
        $region29: #{tpu_custom_call.1} parent=27 // pred_check
          %p1041 = pneg %p87
        $region30: #{tpu_custom_call.1} parent=27 // pred_check_branch
          %1043 = sbr.rel (%p1041) target = $region32
        $region31: #{tpu_custom_call.1} parent=27 // pred_region
          %s1044 = smul.u32 32, %s22
        $region32: #{tpu_custom_call.1} parent=27 // pred_fallthru
          _
        // Predicated region
        $region33: #{tpu_custom_call.1} parent=27 // pred_check
          %p1045 = pneg %p113
        $region34: #{tpu_custom_call.1} parent=27 // pred_check_branch
          %1047 = sbr.rel (%p1045) target = $region36
        $region35: #{tpu_custom_call.1} parent=27 // pred_region
          %s1049 = ssub.s32 16, 16
          %1050 = vsyncadd %s1034, %s1049
          %s1051 = smul.addr %s22, 16
          %s1052 = scalar_lea.hbm %s3, %s1051
          %s1054 = sshll.u32 %s1036, 4
          %s1055 = int_to_ptr.vmem [resolvable:$true] %s1054
          %1057 = dma.vmem_to_hbm [thread:$0]  %s1055, 16, %s1052, %s1034
        $region36: #{tpu_custom_call.1} parent=27 // pred_fallthru
          _
        // Predicated region
        $region37: #{tpu_custom_call.1} parent=27 // pred_check
          %p1058 = pneg %p139
        $region38: #{tpu_custom_call.1} parent=27 // pred_check_branch
          %1060 = sbr.rel (%p1058) target = $region40
        $region39: #{tpu_custom_call.1} parent=27 // pred_region
          %s1062 = ssub.s32 16, 16
          %1063 = vsyncadd %s1038, %s1062
          %s1064 = smul.addr %s22, 16
          %s1065 = scalar_lea.hbm %s4, %s1064
          %s1067 = sshll.u32 %s1040, 4
          %s1068 = int_to_ptr.vmem [resolvable:$true] %s1067
          %1070 = dma.vmem_to_hbm [thread:$0]  %s1068, 16, %s1065, %s1038
        $region40: #{tpu_custom_call.1} parent=27 // pred_fallthru
          _
      $region28: #{tpu_custom_call.1} parent=5 // pred_fallthru
        _
      %p1071 = scmp.le.s32.totalorder 2, %s17
      // Predicated region
      $region41: #{tpu_custom_call.1} parent=5 // pred_check
        %p1072 = pneg %p1071
      $region42: #{tpu_custom_call.1} parent=5 // pred_check_branch
        %1074 = sbr.rel (%p1072) target = $region44
      $region43: #{tpu_custom_call.1} parent=5 // pred_region
        %s1075 = ssub.s32 %s17, 2
        // Predicated region
        $region45: #{tpu_custom_call.1} parent=43 // pred_check
          %p1076 = pneg %p93
        $region46: #{tpu_custom_call.1} parent=43 // pred_check_branch
          %1078 = sbr.rel (%p1076) target = $region48
        $region47: #{tpu_custom_call.1} parent=43 // pred_region
          %s1079 = smul.u32 32, %s23
          %p1080 = scmp.lt.s32.totalorder %s1079, 63
          %s1081 = scalar_select %p1080, %s1079, 63
          %s1082 = smul.addr %s1081, 4
          %s1083 = scalar_lea.vmem %s2, %s1082
        $region48: #{tpu_custom_call.1} parent=43 // pred_fallthru
          _
        // Predicated region
        $region49: #{tpu_custom_call.1} parent=43 // pred_check
          %p1084 = pneg %p119
        $region50: #{tpu_custom_call.1} parent=43 // pred_check_branch
          %1086 = sbr.rel (%p1084) target = $region52
        $region51: #{tpu_custom_call.1} parent=43 // pred_region
          %s1087 = sand.u32 %s104, 1
          %s1088 = scalar_lea.sflag [#allocation3], %s1087
          %s1089 = sand.u32 %s104, 1
          %s1090 = scalar_lea.vmem [#allocation2], %s1089
          %1091 = dma.done %s1088, 16
        $region52: #{tpu_custom_call.1} parent=43 // pred_fallthru
          _
        // Predicated region
        $region53: #{tpu_custom_call.1} parent=43 // pred_check
          %p1092 = pneg %p145
        $region54: #{tpu_custom_call.1} parent=43 // pred_check_branch
          %1094 = sbr.rel (%p1092) target = $region56
        $region55: #{tpu_custom_call.1} parent=43 // pred_region
          %s1095 = sand.u32 %s130, 1
          %s1096 = scalar_lea.sflag [#allocation5], %s1095
          %s1097 = sand.u32 %s130, 1
          %s1098 = scalar_lea.vmem [#allocation4], %s1097
          %1099 = dma.done %s1096, 16
        $region56: #{tpu_custom_call.1} parent=43 // pred_fallthru
          _
      $region44: #{tpu_custom_call.1} parent=5 // pred_fallthru
        _
    $region6: #{tpu_custom_call.1} parent=1 // loop_footer
      %s21 = sadd.s32 1, %s17
    $region7: #{tpu_custom_call.1} parent=1 // loop_footer_branch
      %16 = sbr.rel target = $region3
    $region8: #{tpu_custom_call.1} parent=1 // loop_exit
      _
    %1100 = vsyncpa [#allocation3], 1
    %s1101 = scalar_lea.sflag [#allocation3], 1
    %1102 = vsyncpa %s1101, 1
    %1103 = vsyncpa [#allocation5], 1
    %s1104 = scalar_lea.sflag [#allocation5], 1
    %1105 = vsyncpa %s1104, 1

</llo_original>
